<compile_context>
chip_gen: v5e
topology: v5e:2x2
jax: 0.10.0
libtpu: 0.0.40
codegen_flags: <defaults>
</compile_context>

<pallas_src>
import jax
import jax.numpy as jnp
from jax import lax
from jax.experimental import pallas as pl
from jax.experimental.pallas import tpu as pltpu


def _round_up(x: int, m: int) -> int:
    return ((x + m - 1) // m) * m


def _sublane_multiple(dtype) -> int:
    # f32 -> 8, bf16 -> 16, int8/fp8 -> 32 (packed-sublane tiling).
    itemsize = jnp.dtype(dtype).itemsize
    return max(8, 32 // max(itemsize, 1))


def mynet_loss(outputs: jax.Array, landmarks: jax.Array, *, batch_tile=None) -> jax.Array:
    """Pallas implementation of myNetLoss.forward. Returns a float32 scalar."""
    B, D = outputs.shape
    Dlm = landmarks.shape[1]
    assert landmarks.shape == (B, D + 4), "landmarks must be (B, D+4)"
    assert B >= 1

    mult = max(_sublane_multiple(outputs.dtype), _sublane_multiple(landmarks.dtype))
    if batch_tile is None:
        # ~4 MiB lane-padded f32 per input tile; 2 inputs x double-buffering
        # = ~16 MiB VMEM, safely under the explicit 32 MiB limit below on all
        # of v5e / v6e / v7x, while moving multiple MB of HBM per grid step.
        batch_tile = 8192
    tb = _round_up(min(batch_tile, B), mult)

    nb = pl.cdiv(B, tb)                    # number of batch tiles
    n_split = 2 if nb >= 2 else 1          # megacore split (v7x); no-op on 1-TC chips
    n_inner = pl.cdiv(nb, n_split)         # tiles per core
    last_block = nb - 1

    def kernel(out_ref, lm_ref, loss_ref):
        c = pl.program_id(0)               # core-split axis ("parallel")
        i = pl.program_id(1)               # batch-tile axis ("arbitrary" reduction)

        @pl.when(i == 0)
        def _():
            loss_ref[...] = jnp.zeros_like(loss_ref)

        # Logical (unclamped) rows covered by this grid step.  Duplicate blocks
        # (clamped in the index_map when nb is odd) and the ragged tail are
        # fully masked here, so they contribute exactly 0.
        row0 = (c * n_inner + i) * tb
        rows = row0 + lax.broadcasted_iota(jnp.int32, (tb, 1), 0)   # (tb, 1)
        valid = rows < B

        out = out_ref[...].astype(jnp.float32)      # (tb, D)
        lm = lm_ref[...].astype(jnp.float32)        # (tb, D+4)

        # Numerator: squared L2 distance prediction vs. target landmarks.
        diff = out - lm[:, 4:]                       # in-kernel lane slice (XLU, idle)
        diff = jnp.where(valid, diff, 0.0)           # select, not multiply-by-mask
        a2 = jnp.sum(diff * diff, axis=-1, keepdims=True)          # (tb, 1)

        # Denominator: squared distance between the two reference points.
        ed = lm[:, 0:2] - lm[:, 2:4]                 # (tb, 2)
        b2 = jnp.sum(ed * ed, axis=-1, keepdims=True)               # (tb, 1)
        b2 = jnp.where(valid, b2, 1.0)

        # EUP approx reciprocal (free slot) + one Newton step -> ~f32 accurate.
        r = pl.reciprocal(b2, approx=True)
        r = r * (2.0 - b2 * r)
        per_row = a2 * r                             # (tb, 1)

        partial = jnp.sum(per_row, axis=0, keepdims=True)           # (1, 1)
        # Resident lane-dense accumulator chunk for this core (broadcast add).
        loss_ref[...] += partial

    def in_map(c, i):
        # Clamp so the DMA window is always a valid (at most partially ragged)
        # block; the logical row mask in the kernel discards duplicates.
        return (jnp.minimum(c * n_inner + i, last_block), 0)

    itemsize_out = jnp.dtype(outputs.dtype).itemsize
    itemsize_lm = jnp.dtype(landmarks.dtype).itemsize
    cost = pl.CostEstimate(
        flops=int(B * (3 * D + 10)),
        transcendentals=int(B),
        bytes_accessed=int(B * D * itemsize_out + B * Dlm * itemsize_lm
                           + n_split * 128 * 4),
    )

    result = pl.pallas_call(
        kernel,
        out_shape=jax.ShapeDtypeStruct((1, n_split * 128), jnp.float32),
        grid_spec=pltpu.PrefetchScalarGridSpec(
            num_scalar_prefetch=0,
            grid=(n_split, n_inner),
            in_specs=[
                pl.BlockSpec((tb, D), in_map),      # outputs (full lane width)
                pl.BlockSpec((tb, Dlm), in_map),    # whole landmarks slab
            ],
            # One lane-dense 128-wide chunk per core, resident across the
            # inner (reduction) axis.
            out_specs=pl.BlockSpec((1, 128), lambda c, i: (0, c)),
        ),
        compiler_params=pltpu.CompilerParams(
            dimension_semantics=("parallel", "arbitrary"),
            vmem_limit_bytes=32 * 1024 * 1024,
        ),
        cost_estimate=cost,
    )(outputs, landmarks)

    # Each core's 128-lane chunk holds its partial sum replicated; take lane 0.
    partials = result.reshape(n_split, 128)[:, 0]
    return jnp.sum(partials) if n_split > 1 else partials[0]


def _reference_loss(outputs, landmarks):
    outputs = outputs.astype(jnp.float32)
    landmarks = landmarks.astype(jnp.float32)
    diff = outputs - landmarks[:, 4:]
    a2 = jnp.sum(diff * diff, axis=-1)
    eye = landmarks[:, 0:2] - landmarks[:, 2:4]
    b2 = jnp.sum(eye * eye, axis=-1)
    return jnp.sum(a2 / b2)


if __name__ == "__main__":
    key = jax.random.PRNGKey(0)
    k1, k2, k3, k4 = jax.random.split(key, 4)

    # Small case matching the module (16 landmark points -> 32 coords).
    B, D = 8, 32
    outputs = jax.random.normal(k1, (B, D), dtype=jnp.float32)
    landmarks = jax.random.normal(k2, (B, D + 4), dtype=jnp.float32)

    loss = mynet_loss(outputs, landmarks)
    jax.block_until_ready(loss)
    ref = _reference_loss(outputs, landmarks)
    assert jnp.allclose(loss, ref, rtol=1e-4, atol=1e-3), (loss, ref)

    # Larger, non-tile-aligned case exercising the ragged-tail masking, the
    # two-way core split (odd block count -> clamped duplicate block), and the
    # resident accumulators.
    B2 = 300
    outputs2 = jax.random.normal(k3, (B2, D), dtype=jnp.float32)
    landmarks2 = jax.random.normal(k4, (B2, D + 4), dtype=jnp.float32)
    loss2 = mynet_loss(outputs2, landmarks2, batch_tile=64)
    jax.block_until_ready(loss2)
    ref2 = _reference_loss(outputs2, landmarks2)
    assert jnp.allclose(loss2, ref2, rtol=1e-4, atol=1e-3), (loss2, ref2)

    print("KERNEL_OK")
</pallas_src>

<mosaic_0001>
module attributes {stable_mosaic.version = 11 : i64} {
  func.func @kernel(%arg0: i32, %arg1: i32, %arg2: memref<8x32xf32, #tpu.memory_space<vmem>>, %arg3: memref<8x36xf32, #tpu.memory_space<vmem>>, %arg4: memref<1x128xf32, #tpu.memory_space<vmem>>) attributes {dimension_semantics = [#tpu.dimension_semantics<parallel>, #tpu.dimension_semantics<arbitrary>], iteration_bounds = array<i64: 1, 1>, scalar_prefetch = 0 : i64, scratch_operands = 0 : i64, tpu.core_type = #tpu.core_type<tc>, window_params = [{transform_indices = @transform_0, window_bounds = array<i64: 8, 32>}, {transform_indices = @transform_1, window_bounds = array<i64: 8, 36>}, {transform_indices = @transform_2, window_bounds = array<i64: 1, 128>}]} {
    %c0_i32 = arith.constant 0 : i32
    %0 = arith.cmpi eq, %arg1, %c0_i32 : i32
    %1 = arith.extui %0 : i1 to i32
    %c0_i32_0 = arith.constant 0 : i32
    %2 = arith.cmpi ne, %1, %c0_i32_0 : i32
    scf.if %2 {
      %cst_14 = arith.constant 0.000000e+00 : f32
      %42 = vector.broadcast %cst_14 : f32 to vector<1x128xf32>
      %c0_15 = arith.constant 0 : index
      %c0_16 = arith.constant 0 : index
      %43 = vector.load %arg4[%c0_15, %c0_16] : memref<1x128xf32, #tpu.memory_space<vmem>>, vector<1x128xf32>
      tpu.vector_store %arg4[%c0_15, %c0_16], %42 {strides = array<i32>} : memref<1x128xf32, #tpu.memory_space<vmem>>, vector<1x128xf32>,
    } else {
    }
    %c1_i32 = arith.constant 1 : i32
    %3 = arith.muli %arg0, %c1_i32 : i32
    %4 = arith.addi %3, %arg1 : i32
    %c8_i32 = arith.constant 8 : i32
    %5 = arith.muli %4, %c8_i32 : i32
    %6 = tpu.iota {dimensions = array<i32: 0>} : vector<8x1xi32>
    %7 = vector.broadcast %5 : i32 to vector<8x1xi32>
    %8 = arith.addi %7, %6 : vector<8x1xi32>
    %c8_i32_1 = arith.constant 8 : i32
    %9 = vector.broadcast %c8_i32_1 : i32 to vector<8x1xi32>
    %10 = arith.cmpi slt, %8, %9 : vector<8x1xi32>
    %c0 = arith.constant 0 : index
    %c0_2 = arith.constant 0 : index
    %11 = vector.load %arg2[%c0, %c0_2] : memref<8x32xf32, #tpu.memory_space<vmem>>, vector<8x32xf32>
    %c0_3 = arith.constant 0 : index
    %c0_4 = arith.constant 0 : index
    %12 = vector.load %arg3[%c0_3, %c0_4] : memref<8x36xf32, #tpu.memory_space<vmem>>, vector<8x36xf32>
    %13 = vector.extract_strided_slice %12 {offsets = [0, 4], sizes = [8, 32], strides = [1, 1]} : vector<8x36xf32> to vector<8x32xf32>
    %14 = arith.subf %11, %13 : vector<8x32xf32>
    %cst = arith.constant 0.000000e+00 : f32
    %15 = vector.shape_cast %10 : vector<8x1xi1> to vector<8x1xi1>
    %16 = vector.broadcast %15 : vector<8x1xi1> to vector<8x32xi1>
    %17 = vector.broadcast %cst : f32 to vector<8x32xf32>
    %18 = arith.select %16, %14, %17 : vector<8x32xi1>, vector<8x32xf32>
    %19 = arith.mulf %18, %18 : vector<8x32xf32>
    %cst_5 = arith.constant dense<0.000000e+00> : vector<8xf32>
    %20 = vector.multi_reduction <add>, %19, %cst_5 [1] : vector<8x32xf32> to vector<8xf32>
    %21 = vector.shape_cast %20 : vector<8xf32> to vector<8x1xf32>
    %22 = vector.extract_strided_slice %12 {offsets = [0, 0], sizes = [8, 2], strides = [1, 1]} : vector<8x36xf32> to vector<8x2xf32>
    %23 = vector.extract_strided_slice %12 {offsets = [0, 2], sizes = [8, 2], strides = [1, 1]} : vector<8x36xf32> to vector<8x2xf32>
    %24 = arith.subf %22, %23 : vector<8x2xf32>
    %25 = arith.mulf %24, %24 : vector<8x2xf32>
    %cst_6 = arith.constant dense<0.000000e+00> : vector<8xf32>
    %26 = vector.multi_reduction <add>, %25, %cst_6 [1] : vector<8x2xf32> to vector<8xf32>
    %27 = vector.shape_cast %26 : vector<8xf32> to vector<8x1xf32>
    %cst_7 = arith.constant 1.000000e+00 : f32
    %28 = vector.broadcast %cst_7 : f32 to vector<8x1xf32>
    %29 = arith.select %10, %27, %28 : vector<8x1xi1>, vector<8x1xf32>
    %30 = tpu.reciprocal %29 {approx = true} : vector<8x1xf32> -> vector<8x1xf32>
    %31 = arith.mulf %29, %30 : vector<8x1xf32>
    %cst_8 = arith.constant 2.000000e+00 : f32
    %32 = vector.broadcast %cst_8 : f32 to vector<8x1xf32>
    %33 = arith.subf %32, %31 : vector<8x1xf32>
    %34 = arith.mulf %30, %33 : vector<8x1xf32>
    %35 = arith.mulf %21, %34 : vector<8x1xf32>
    %cst_9 = arith.constant dense<0.000000e+00> : vector<1xf32>
    %36 = vector.multi_reduction <add>, %35, %cst_9 [0] : vector<8x1xf32> to vector<1xf32>
    %37 = vector.shape_cast %36 : vector<1xf32> to vector<1x1xf32>
    %c0_10 = arith.constant 0 : index
    %c0_11 = arith.constant 0 : index
    %38 = vector.load %arg4[%c0_10, %c0_11] : memref<1x128xf32, #tpu.memory_space<vmem>>, vector<1x128xf32>
    %39 = vector.broadcast %37 : vector<1x1xf32> to vector<1x128xf32>
    %40 = arith.addf %38, %39 : vector<1x128xf32>
    %c0_12 = arith.constant 0 : index
    %c0_13 = arith.constant 0 : index
    %41 = vector.load %arg4[%c0_12, %c0_13] : memref<1x128xf32, #tpu.memory_space<vmem>>, vector<1x128xf32>
    tpu.vector_store %arg4[%c0_12, %c0_13], %40 {strides = array<i32>} : memref<1x128xf32, #tpu.memory_space<vmem>>, vector<1x128xf32>,
    return
  }
  func.func @transform_0(%arg0: i32, %arg1: i32) -> (i32, i32) {
    %c1_i32 = arith.constant 1 : i32
    %0 = arith.muli %arg0, %c1_i32 : i32
    %1 = arith.addi %0, %arg1 : i32
    %c0_i32 = arith.constant 0 : i32
    %2 = arith.minsi %1, %c0_i32 : i32
    %c0_i32_0 = arith.constant 0 : i32
    %c0_i32_1 = arith.constant 0 : i32
    return %2, %c0_i32_0 : i32, i32
  }
  func.func @transform_1(%arg0: i32, %arg1: i32) -> (i32, i32) {
    %c1_i32 = arith.constant 1 : i32
    %0 = arith.muli %arg0, %c1_i32 : i32
    %1 = arith.addi %0, %arg1 : i32
    %c0_i32 = arith.constant 0 : i32
    %2 = arith.minsi %1, %c0_i32 : i32
    %c0_i32_0 = arith.constant 0 : i32
    %c0_i32_1 = arith.constant 0 : i32
    return %2, %c0_i32_0 : i32, i32
  }
  func.func @transform_2(%arg0: i32, %arg1: i32) -> (i32, i32) {
    %c0_i32 = arith.constant 0 : i32
    %c0_i32_0 = arith.constant 0 : i32
    return %c0_i32, %arg0 : i32, i32
  }
}

</mosaic_0001>

<llo_original>
// kernel: tpu_custom_call.1
$region0: #{tpu_custom_call.1}
  #allocation0 [shape = 'u32[]', space=smem, size = 0x4, offset = 0x4, fixed_abs, tag = 'smem constant byte address 0x4 - core index']
  #allocation1 [shape = 'u32[72,128]{1,0:T(1,128)}', space=vmem, size = 0x9000, scoped, tag = 'internal scratch']
  %s0 = inlined_call_operand.hbm [shape: f32[8,32], index: 0, kind: input, shape index: {}]
  %s1 = inlined_call_operand.hbm [shape: f32[8,36], index: 1, kind: input, shape index: {}]
  %s2 = inlined_call_operand.hbm [shape: f32[1,128], index: 2, kind: output, shape index: {}]
  %s3 = sld [smem:[#allocation0]]
  $region30: #{tpu_custom_call.1} parent=0
    _
  %s5 = ssub.s32 1, %s3
  %s6 = scalar_select 0, %s5, %s3
  $region1: #{tpu_custom_call.1} parent=0
    #allocation2 [shape = 'u8[4096]{0}', space=vmem, size = 0x1000, scoped, tag = 'input window, operand 0, single buffered']
    #allocation3 [shape = 's32[1]{0}', space=sflag, size = 0x4, scoped, tag = 'scoped memory for tpu_custom_call.1']
    #allocation4 [shape = 's32[1]{0}', space=sflag, size = 0x4, scoped, tag = 'scoped memory for tpu_custom_call.1']
    #allocation5 [shape = 'u8[4096]{0}', space=vmem, size = 0x1000, scoped, tag = 'input window, operand 1, single buffered']
    #allocation6 [shape = 's32[1]{0}', space=sflag, size = 0x4, scoped, tag = 'scoped memory for tpu_custom_call.1']
    #allocation7 [shape = 'u8[512]{0}', space=vmem, size = 0x400, scoped, tag = 'output window, operand 0, single buffered']
    %7 = vsyncpa [#allocation3], 0
    %8 = vsyncpa [#allocation6], 0
    %9 = vsyncpa [#allocation4], 0
    // Predicated region
    $region2: #{tpu_custom_call.1} parent=1 // pred_check
      _
    $region3: #{tpu_custom_call.1} parent=1 // pred_check_branch
      %11 = sbr.rel (0) target = $region5
    $region4: #{tpu_custom_call.1} parent=1 // pred_region
      %s12 = sadd.s32 0, 0
      %p13 = scmp.lt.s32.totalorder %s12, 0
      %s14 = scalar_select %p13, %s12, 0
      %16 = vsyncadd [#allocation3], 0
      %s17 = smul.addr %s14, 8
      %s18 = scalar_lea.hbm %s0, %s17
      %s20 = sshll.u32 %s18, 4
      %s21 = int_to_ptr.hbm [resolvable:$true] %s20
      %s22 = sshll.u32 [#allocation2], 4
      %s23 = int_to_ptr.vmem [resolvable:$true] %s22
      %25 = dma.hbm_to_vmem [thread:$0]  %s21, 128, %s23, [#allocation3]
    $region5: #{tpu_custom_call.1} parent=1 // pred_fallthru
      _
    // Predicated region
    $region6: #{tpu_custom_call.1} parent=1 // pred_check
      _
    $region7: #{tpu_custom_call.1} parent=1 // pred_check_branch
      %27 = sbr.rel (0) target = $region9
    $region8: #{tpu_custom_call.1} parent=1 // pred_region
      %s28 = sadd.s32 0, 0
      %p29 = scmp.lt.s32.totalorder %s28, 0
      %s30 = scalar_select %p29, %s28, 0
      %32 = vsyncadd [#allocation6], 0
      %s33 = smul.addr %s30, 8
      %s34 = scalar_lea.hbm %s1, %s33
      %s36 = sshll.u32 %s34, 4
      %s37 = int_to_ptr.hbm [resolvable:$true] %s36
      %s38 = sshll.u32 [#allocation5], 4
      %s39 = int_to_ptr.vmem [resolvable:$true] %s38
      %41 = dma.hbm_to_vmem [thread:$0]  %s37, 128, %s39, [#allocation6]
    $region9: #{tpu_custom_call.1} parent=1 // pred_fallthru
      _
    // Predicated region
    $region10: #{tpu_custom_call.1} parent=1 // pred_check
      _
    $region11: #{tpu_custom_call.1} parent=1 // pred_check_branch
      %43 = sbr.rel (0) target = $region13
    $region12: #{tpu_custom_call.1} parent=1 // pred_region
      %45 = dma.done [#allocation3], 128
    $region13: #{tpu_custom_call.1} parent=1 // pred_fallthru
      _
    // Predicated region
    $region14: #{tpu_custom_call.1} parent=1 // pred_check
      _
    $region15: #{tpu_custom_call.1} parent=1 // pred_check_branch
      %47 = sbr.rel (0) target = $region17
    $region16: #{tpu_custom_call.1} parent=1 // pred_region
      %49 = dma.done [#allocation6], 128
    $region17: #{tpu_custom_call.1} parent=1 // pred_fallthru
      _
    %s50 = sadd.s32 0, 0
    %p51 = scmp.lt.s32.totalorder %s50, 0
    %s52 = scalar_select %p51, %s50, 0
    %s53 = sadd.s32 0, 0
    %p54 = scmp.lt.s32.totalorder %s53, 0
    %s55 = scalar_select %p54, %s53, 0
    %p56 = scmp.eq.s32.totalorder 0, 0
    // Predicated region
    $region18: #{tpu_custom_call.1} parent=1 // pred_check
      %p57 = pneg %p56
    $region19: #{tpu_custom_call.1} parent=1 // pred_check_branch
      %59 = sbr.rel (%p57) target = $region21
    $region20: #{tpu_custom_call.1} parent=1 // pred_region
      %60 = vst [vmem:[#allocation7] sm:$0x1] 0.0
    $region21: #{tpu_custom_call.1} parent=1 // pred_fallthru
      _
    %s61 = sadd.s32 0, 0
    %s62 = smul.u32 %s61, 8
    %v63 = vlaneseq
    %v64 = vshrl.u32 %v63, 7
    %v65 = vstv %s62
    %v66 = vadd.s32 %v65, %v64
    %vm67 = vcmp.lt.s32.totalorder %v66, 8
    %v68 = vld [vmem:[#allocation2] sm:$0xff]
    %v69 = vld [vmem:[#allocation5] sm:$0xff]
    %71 = vrot.lane.b32.xlu0 %v69, 124
    %v72 = vpop.permute.xlu0 %71
    %v74 = vsub.f32 %v68, %v72
    %v75 = vsel %vm67, 1, 0
    %vm76 = vcmp.eq.s32.totalorder %v75, 1
    %v77 = vsel %vm76, %v74, 0.0
    %v78 = vmul.f32 %v77, %v77
    %vm79 = vcmask 261120
    %v80 = vsel %vm79, %v78, 0.0
    %81 = vadd.xlane.f32.xlu0 %v80
    %v82 = vpop.xlane.xlu0 %81
    %83 = vrot.lane.b32.xlu0 %v69, 126
    %v84 = vpop.permute.xlu0 %83
    %v86 = vsub.f32 %v69, %v84
    %v87 = vmul.f32 %v86, %v86
    %vm88 = vcmask 15360
    %v89 = vsel %vm88, %v87, 0.0
    %90 = vadd.xlane.f32.xlu0 %v89
    %v91 = vpop.xlane.xlu0 %90
    %v92 = vsel %vm67, %v91, 1.0
    %v93 = vrcp.pop %v92
    %v94 = vmul.f32 %v92, %v93
    %v95 = vsub.f32 2.0, %v94
    %v96 = vmul.f32 %v93, %v95
    %v97 = vmul.f32 %v82, %v96
    %v98 = vrot.slane %v97, 4
    %v99 = vadd.f32 %v97, %v98
    %v100 = vrot.slane %v99, 2
    %v101 = vadd.f32 %v99, %v100
    %v102 = vrot.slane %v101, 1
    %v103 = vadd.f32 %v101, %v102
    %v104 = vld [vmem:[#allocation7] sm:$0x1]
    %v105 = vadd.f32 %v104, %v103
    %106 = vst [vmem:[#allocation7] sm:$0x1] %v105
    // Predicated region
    $region22: #{tpu_custom_call.1} parent=1 // pred_check
      _
    $region23: #{tpu_custom_call.1} parent=1 // pred_check_branch
      %108 = sbr.rel (0) target = $region25
    $region24: #{tpu_custom_call.1} parent=1 // pred_region
      %110 = vsyncadd [#allocation4], 0
      %s112 = sshll.u32 [#allocation7], 4
      %s113 = int_to_ptr.vmem [resolvable:$true] %s112
      %s114 = sshll.u32 %s2, 4
      %s115 = int_to_ptr.hbm [resolvable:$true] %s114
      %117 = dma.vmem_to_hbm [thread:$0]  %s113, 16, %s115, [#allocation4]
    $region25: #{tpu_custom_call.1} parent=1 // pred_fallthru
      _
    // Predicated region
    $region26: #{tpu_custom_call.1} parent=1 // pred_check
      _
    $region27: #{tpu_custom_call.1} parent=1 // pred_check_branch
      %119 = sbr.rel (0) target = $region29
    $region28: #{tpu_custom_call.1} parent=1 // pred_region
      %121 = dma.done [#allocation4], 16
    $region29: #{tpu_custom_call.1} parent=1 // pred_fallthru
      _
    %122 = vsyncpa [#allocation3], 1
    %123 = vsyncpa [#allocation6], 1
    %124 = vsyncpa [#allocation4], 1

</llo_original>
